<compile_context>
chip_gen: v7x
topology: tpu7x:2x2x1
jax: 0.10.0
libtpu: 0.0.40
codegen_flags: <defaults>
</compile_context>

<pallas_src>
import functools

import jax
import jax.numpy as jnp
from jax.experimental import pallas as pl
from jax.experimental.pallas import tpu as pltpu


def _round_up(x: int, m: int) -> int:
    return ((x + m - 1) // m) * m


def _choose_row_tile(n: int) -> int:
    if n <= 256:
        return _round_up(max(n, 8), 8)                 # single small tile
    # >=2 tiles (keeps both v7x TensorCores busy); 128-aligned for lane-dense stores
    return min(512, _round_up(pl.cdiv(n, 2), 128))


def output_block_kernel(x_ref, w_ref, b_ref, wout_t_ref, out_ref, xs_ref, *, d_real):
    """Fused 3x Residual(mlp_num=2) + final bias-free Dense on one row tile.

    x_ref      : (TN, D)          input rows, un-padded feature dim
    w_ref      : (3, 2, Dp, Dp)   residual weights, (in, out) layout, MXU dtype
    b_ref      : (8, Dp)          residual biases (rows 0..5 used), f32
    wout_t_ref : (Pp, Dp)         final dense weight, transposed, MXU dtype
    out_ref    : (Pp, TN)         lane-dense output tile (row p = prediction p)
    xs_ref     : (TN, Dp) f32     VMEM scratch used to lane-pad x to Dp
    """
    mxu_dt = w_ref.dtype

    # Lane-pad x to Dp inside VMEM (padded lanes are exactly zero -> transparent).
    xs_ref[...] = jnp.zeros_like(xs_ref)
    xs_ref[:, :d_real] = x_ref[...].astype(jnp.float32)
    x = xs_ref[...]                                    # (TN, Dp) f32
    b = b_ref[...]                                     # (8, Dp)  f32

    for r in range(3):                                 # static unroll, 3 residual blocks
        h = jnp.dot(x.astype(mxu_dt), w_ref[r, 0],
                    preferred_element_type=jnp.float32)
        h = jnp.maximum(h + b[2 * r:2 * r + 1, :], 0.0)           # inner ReLU
        h = jnp.dot(h.astype(mxu_dt), w_ref[r, 1],
                    preferred_element_type=jnp.float32)
        h = h + b[2 * r + 1:2 * r + 2, :]
        x = x + h                                      # residual skip
        if r < 2:                                      # end activation on blocks 0,1 only
            x = jnp.maximum(x, 0.0)

    # Final Dense (no bias), produced directly in (P, TN) orientation:
    # out[p, n] = sum_d wout_t[p, d] * x[n, d]  ==  (x @ w_out)^T
    out = jax.lax.dot_general(
        wout_t_ref[...], x.astype(mxu_dt),
        dimension_numbers=(((1,), (1,)), ((), ())),
        preferred_element_type=jnp.float32)            # (Pp, TN)
    out_ref[...] = out.astype(out_ref.dtype)


def pack_params(res_w, res_b, w_out, *, mxu_dtype=jnp.bfloat16):
    """Pad / lay out parameters ONCE (call at init, outside the hot path).

    res_w: (3, 2, D, D) in (in, out) layout; res_b: (3, 2, 1, D); w_out: (D, P).
    """
    D = res_w.shape[-1]
    P = w_out.shape[-1]
    D_PAD = _round_up(max(D, 128), 128)
    P_PAD = 8                                          # sublane-aligned output rows
    w_pad = (jnp.zeros((3, 2, D_PAD, D_PAD), mxu_dtype)
             .at[:, :, :D, :D].set(res_w.astype(mxu_dtype)))
    b_pad = (jnp.zeros((8, D_PAD), jnp.float32)
             .at[:6, :D].set(res_b.reshape(6, D).astype(jnp.float32)))
    wout_t = (jnp.zeros((P_PAD, D_PAD), mxu_dtype)
              .at[:P, :D].set(w_out.T.astype(mxu_dtype)))
    return {"w": w_pad, "b": b_pad, "wout_t": wout_t, "d": D, "p": P}


def output_block(final_feature, packed):
    """final_feature: (N, D).  Returns (N, P).  `packed` comes from pack_params()."""
    N, D = final_feature.shape
    assert D == packed["d"], (D, packed["d"])
    P = packed["p"]
    D_PAD = packed["w"].shape[-1]
    P_PAD = packed["wout_t"].shape[0]

    TN = _choose_row_tile(N)
    num_tiles = pl.cdiv(N, TN)
    N_PAD = num_tiles * TN

    # Advisory scheduling hint with REAL (unpadded) work, not padded sizes.
    itemsize = jnp.dtype(final_feature.dtype).itemsize
    flops = 2 * N * D * D * 6 + 2 * N * D * P
    bytes_accessed = (
        itemsize * (N * D + N * P)
        + packed["w"].dtype.itemsize * 6 * D * D
        + 4 * 6 * D
        + packed["wout_t"].dtype.itemsize * D * P
    )

    out_padded = pl.pallas_call(
        functools.partial(output_block_kernel, d_real=D),
        out_shape=jax.ShapeDtypeStruct((P_PAD, N_PAD), final_feature.dtype),
        grid=(num_tiles,),
        in_specs=[
            pl.BlockSpec((TN, D), lambda i: (i, 0)),                 # streamed rows
            pl.BlockSpec(packed["w"].shape, lambda i: (0, 0, 0, 0)),  # resident
            pl.BlockSpec(packed["b"].shape, lambda i: (0, 0)),        # resident
            pl.BlockSpec(packed["wout_t"].shape, lambda i: (0, 0)),   # resident
        ],
        out_specs=pl.BlockSpec((P_PAD, TN), lambda i: (0, i)),
        scratch_shapes=[pltpu.VMEM((TN, D_PAD), jnp.float32)],
        compiler_params=pltpu.CompilerParams(
            dimension_semantics=("parallel",),   # batch tiles -> both TCs on v7x
        ),
        cost_estimate=pl.CostEstimate(
            flops=flops, transcendentals=0, bytes_accessed=bytes_accessed),
    )(final_feature, packed["w"], packed["b"], packed["wout_t"])

    # (P_PAD, N_PAD) lane-dense slab -> (N, P)
    return out_padded[:P, :N].T


# ----------------------------- references / test -----------------------------

def reference_f32(final_feature, res_w, res_b, w_out):
    """Pure-JAX f32 reference matching the PyTorch module semantics."""
    x = final_feature.astype(jnp.float32)
    for r in range(3):
        h = jnp.maximum(x @ res_w[r, 0] + res_b[r, 0], 0.0)
        h = h @ res_w[r, 1] + res_b[r, 1]
        x = x + h
        if r < 2:
            x = jnp.maximum(x, 0.0)
    return x @ w_out


def reference_bf16_mm(final_feature, res_w, res_b, w_out):
    """Same math, matmul inputs cast to bf16 / f32 accumulate (mirrors the kernel)."""
    def mm(a, b):
        return jnp.dot(a.astype(jnp.bfloat16), b.astype(jnp.bfloat16),
                       preferred_element_type=jnp.float32)
    x = final_feature.astype(jnp.float32)
    for r in range(3):
        h = jnp.maximum(mm(x, res_w[r, 0]) + res_b[r, 0], 0.0)
        h = mm(h, res_w[r, 1]) + res_b[r, 1]
        x = x + h
        if r < 2:
            x = jnp.maximum(x, 0.0)
    return mm(x, w_out)


def _make_inputs(key, N, D, P):
    k_x, k_w, k_b, k_o = jax.random.split(key, 4)
    final_feature = jax.random.normal(k_x, (N, D), dtype=jnp.float32)
    res_w = jax.random.normal(k_w, (3, 2, D, D), dtype=jnp.float32) / jnp.sqrt(D)
    res_b = jax.random.normal(k_b, (3, 2, 1, D), dtype=jnp.float32) * 0.01
    w_out = jax.random.normal(k_o, (D, P), dtype=jnp.float32) / jnp.sqrt(D)
    return final_feature, res_w, res_b, w_out


def _check(out, x, rw, rb, wo, tag):
    ref_bf = reference_bf16_mm(x, rw, rb, wo)
    ref_32 = reference_f32(x, rw, rb, wo)
    assert jnp.allclose(out, ref_bf, atol=1e-3, rtol=1e-3), \
        f"mismatch vs bf16-matmul reference ({tag})"
    rel = float(jnp.max(jnp.abs(out - ref_32)) / (jnp.max(jnp.abs(ref_32)) + 1e-6))
    assert rel < 5e-2, f"relative error vs f32 reference too large ({tag}): {rel}"


if __name__ == "__main__":
    # Shapes implied by the module: output_dim (hidden) = 32, num_pred = 1 ('Drugs').
    D, P = 32, 1

    # Small batch (original use case): single 8-row tile.
    x, rw, rb, wo = _make_inputs(jax.random.PRNGKey(0), 8, D, P)
    packed = pack_params(rw, rb, wo)            # built once, outside the hot path
    out = jax.block_until_ready(output_block(x, packed))
    assert out.shape == (8, P), out.shape
    _check(out, x, rw, rb, wo, "N=8")

    # Larger batch: exercises the multi-tile grid / resident-weight / megacore path.
    x, rw, rb, wo = _make_inputs(jax.random.PRNGKey(1), 512, D, P)
    packed = pack_params(rw, rb, wo)
    out = jax.block_until_ready(output_block(x, packed))
    assert out.shape == (512, P), out.shape
    _check(out, x, rw, rb, wo, "N=512")

    print("KERNEL_OK")
</pallas_src>

<mosaic_0001>
module attributes {stable_mosaic.version = 11 : i64} {
  func.func @output_block_kernel(%arg0: i32, %arg1: memref<8x32xf32, #tpu.memory_space<vmem>>, %arg2: memref<3x2x128x128xbf16, #tpu.memory_space<vmem>>, %arg3: memref<8x128xf32, #tpu.memory_space<vmem>>, %arg4: memref<8x128xbf16, #tpu.memory_space<vmem>>, %arg5: memref<8x8xf32, #tpu.memory_space<vmem>>, %arg6: memref<8x128xf32, #tpu.memory_space<vmem>>) attributes {dimension_semantics = [#tpu.dimension_semantics<parallel>], iteration_bounds = array<i64: 1>, scalar_prefetch = 0 : i64, scratch_operands = 1 : i64, tpu.core_type = #tpu.core_type<tc>, window_params = [{transform_indices = @transform_0, window_bounds = array<i64: 8, 32>}, {pipeline_mode = #tpu.pipeline_mode<synchronous>, transform_indices = @transform_1, window_bounds = array<i64: 3, 2, 128, 128>}, {pipeline_mode = #tpu.pipeline_mode<synchronous>, transform_indices = @transform_2, window_bounds = array<i64: 8, 128>}, {pipeline_mode = #tpu.pipeline_mode<synchronous>, transform_indices = @transform_3, window_bounds = array<i64: 8, 128>}, {transform_indices = @transform_4, window_bounds = array<i64: 8, 8>}]} {
    %cst = arith.constant 0.000000e+00 : f32
    %0 = vector.broadcast %cst : f32 to vector<8x128xf32>
    %c0 = arith.constant 0 : index
    %c0_0 = arith.constant 0 : index
    %1 = vector.load %arg6[%c0, %c0_0] : memref<8x128xf32, #tpu.memory_space<vmem>>, vector<8x128xf32>
    tpu.vector_store %arg6[%c0, %c0_0], %0 {strides = array<i32>} : memref<8x128xf32, #tpu.memory_space<vmem>>, vector<8x128xf32>,
    %c0_1 = arith.constant 0 : index
    %c0_2 = arith.constant 0 : index
    %2 = vector.load %arg1[%c0_1, %c0_2] : memref<8x32xf32, #tpu.memory_space<vmem>>, vector<8x32xf32>
    %c0_3 = arith.constant 0 : index
    %c0_4 = arith.constant 0 : index
    %3 = vector.load %arg6[%c0_3, %c0_4] : memref<8x128xf32, #tpu.memory_space<vmem>>, vector<8x32xf32>
    tpu.vector_store %arg6[%c0_3, %c0_4], %2 {strides = array<i32>} : memref<8x128xf32, #tpu.memory_space<vmem>>, vector<8x32xf32>,
    %c0_5 = arith.constant 0 : index
    %c0_6 = arith.constant 0 : index
    %4 = vector.load %arg6[%c0_5, %c0_6] : memref<8x128xf32, #tpu.memory_space<vmem>>, vector<8x128xf32>
    %c0_7 = arith.constant 0 : index
    %c0_8 = arith.constant 0 : index
    %5 = vector.load %arg3[%c0_7, %c0_8] : memref<8x128xf32, #tpu.memory_space<vmem>>, vector<8x128xf32>
    %6 = arith.truncf %4 : vector<8x128xf32> to vector<8x128xbf16>
    %c0_9 = arith.constant 0 : index
    %c0_10 = arith.constant 0 : index
    %c0_11 = arith.constant 0 : index
    %c0_12 = arith.constant 0 : index
    %7 = vector.load %arg2[%c0_9, %c0_10, %c0_11, %c0_12] : memref<3x2x128x128xbf16, #tpu.memory_space<vmem>>, vector<1x1x128x128xbf16>
    %8 = vector.shape_cast %7 : vector<1x1x128x128xbf16> to vector<128x128xbf16>
    %cst_13 = arith.constant dense<0.000000e+00> : vector<8x128xf32>
    %9 = tpu.matmul %6, %8, %cst_13 {dimension_numbers = #tpu.dot_dimension_numbers<[1], [0], [0], [1], [0, 0, 1, 1], [], []>} : vector<8x128xbf16>, vector<128x128xbf16>, vector<8x128xf32> -> vector<8x128xf32>
    %10 = vector.extract_strided_slice %5 {offsets = [0, 0], sizes = [1, 128], strides = [1, 1]} : vector<8x128xf32> to vector<1x128xf32>
    %11 = vector.broadcast %10 : vector<1x128xf32> to vector<8x128xf32>
    %12 = arith.addf %9, %11 : vector<8x128xf32>
    %cst_14 = arith.constant 0.000000e+00 : f32
    %13 = vector.broadcast %cst_14 : f32 to vector<8x128xf32>
    %14 = arith.maximumf %12, %13 : vector<8x128xf32>
    %15 = arith.truncf %14 : vector<8x128xf32> to vector<8x128xbf16>
    %c0_15 = arith.constant 0 : index
    %c1 = arith.constant 1 : index
    %c0_16 = arith.constant 0 : index
    %c0_17 = arith.constant 0 : index
    %16 = vector.load %arg2[%c0_15, %c1, %c0_16, %c0_17] : memref<3x2x128x128xbf16, #tpu.memory_space<vmem>>, vector<1x1x128x128xbf16>
    %17 = vector.shape_cast %16 : vector<1x1x128x128xbf16> to vector<128x128xbf16>
    %cst_18 = arith.constant dense<0.000000e+00> : vector<8x128xf32>
    %18 = tpu.matmul %15, %17, %cst_18 {dimension_numbers = #tpu.dot_dimension_numbers<[1], [0], [0], [1], [0, 0, 1, 1], [], []>} : vector<8x128xbf16>, vector<128x128xbf16>, vector<8x128xf32> -> vector<8x128xf32>
    %19 = vector.extract_strided_slice %5 {offsets = [1, 0], sizes = [1, 128], strides = [1, 1]} : vector<8x128xf32> to vector<1x128xf32>
    %20 = vector.broadcast %19 : vector<1x128xf32> to vector<8x128xf32>
    %21 = arith.addf %18, %20 : vector<8x128xf32>
    %22 = arith.addf %4, %21 : vector<8x128xf32>
    %cst_19 = arith.constant 0.000000e+00 : f32
    %23 = vector.broadcast %cst_19 : f32 to vector<8x128xf32>
    %24 = arith.maximumf %22, %23 : vector<8x128xf32>
    %25 = arith.truncf %24 : vector<8x128xf32> to vector<8x128xbf16>
    %c1_20 = arith.constant 1 : index
    %c0_21 = arith.constant 0 : index
    %c0_22 = arith.constant 0 : index
    %c0_23 = arith.constant 0 : index
    %26 = vector.load %arg2[%c1_20, %c0_21, %c0_22, %c0_23] : memref<3x2x128x128xbf16, #tpu.memory_space<vmem>>, vector<1x1x128x128xbf16>
    %27 = vector.shape_cast %26 : vector<1x1x128x128xbf16> to vector<128x128xbf16>
    %cst_24 = arith.constant dense<0.000000e+00> : vector<8x128xf32>
    %28 = tpu.matmul %25, %27, %cst_24 {dimension_numbers = #tpu.dot_dimension_numbers<[1], [0], [0], [1], [0, 0, 1, 1], [], []>} : vector<8x128xbf16>, vector<128x128xbf16>, vector<8x128xf32> -> vector<8x128xf32>
    %29 = vector.extract_strided_slice %5 {offsets = [2, 0], sizes = [1, 128], strides = [1, 1]} : vector<8x128xf32> to vector<1x128xf32>
    %30 = vector.broadcast %29 : vector<1x128xf32> to vector<8x128xf32>
    %31 = arith.addf %28, %30 : vector<8x128xf32>
    %cst_25 = arith.constant 0.000000e+00 : f32
    %32 = vector.broadcast %cst_25 : f32 to vector<8x128xf32>
    %33 = arith.maximumf %31, %32 : vector<8x128xf32>
    %34 = arith.truncf %33 : vector<8x128xf32> to vector<8x128xbf16>
    %c1_26 = arith.constant 1 : index
    %c1_27 = arith.constant 1 : index
    %c0_28 = arith.constant 0 : index
    %c0_29 = arith.constant 0 : index
    %35 = vector.load %arg2[%c1_26, %c1_27, %c0_28, %c0_29] : memref<3x2x128x128xbf16, #tpu.memory_space<vmem>>, vector<1x1x128x128xbf16>
    %36 = vector.shape_cast %35 : vector<1x1x128x128xbf16> to vector<128x128xbf16>
    %cst_30 = arith.constant dense<0.000000e+00> : vector<8x128xf32>
    %37 = tpu.matmul %34, %36, %cst_30 {dimension_numbers = #tpu.dot_dimension_numbers<[1], [0], [0], [1], [0, 0, 1, 1], [], []>} : vector<8x128xbf16>, vector<128x128xbf16>, vector<8x128xf32> -> vector<8x128xf32>
    %38 = vector.extract_strided_slice %5 {offsets = [3, 0], sizes = [1, 128], strides = [1, 1]} : vector<8x128xf32> to vector<1x128xf32>
    %39 = vector.broadcast %38 : vector<1x128xf32> to vector<8x128xf32>
    %40 = arith.addf %37, %39 : vector<8x128xf32>
    %41 = arith.addf %24, %40 : vector<8x128xf32>
    %cst_31 = arith.constant 0.000000e+00 : f32
    %42 = vector.broadcast %cst_31 : f32 to vector<8x128xf32>
    %43 = arith.maximumf %41, %42 : vector<8x128xf32>
    %44 = arith.truncf %43 : vector<8x128xf32> to vector<8x128xbf16>
    %c2 = arith.constant 2 : index
    %c0_32 = arith.constant 0 : index
    %c0_33 = arith.constant 0 : index
    %c0_34 = arith.constant 0 : index
    %45 = vector.load %arg2[%c2, %c0_32, %c0_33, %c0_34] : memref<3x2x128x128xbf16, #tpu.memory_space<vmem>>, vector<1x1x128x128xbf16>
    %46 = vector.shape_cast %45 : vector<1x1x128x128xbf16> to vector<128x128xbf16>
    %cst_35 = arith.constant dense<0.000000e+00> : vector<8x128xf32>
    %47 = tpu.matmul %44, %46, %cst_35 {dimension_numbers = #tpu.dot_dimension_numbers<[1], [0], [0], [1], [0, 0, 1, 1], [], []>} : vector<8x128xbf16>, vector<128x128xbf16>, vector<8x128xf32> -> vector<8x128xf32>
    %48 = vector.extract_strided_slice %5 {offsets = [4, 0], sizes = [1, 128], strides = [1, 1]} : vector<8x128xf32> to vector<1x128xf32>
    %49 = vector.broadcast %48 : vector<1x128xf32> to vector<8x128xf32>
    %50 = arith.addf %47, %49 : vector<8x128xf32>
    %cst_36 = arith.constant 0.000000e+00 : f32
    %51 = vector.broadcast %cst_36 : f32 to vector<8x128xf32>
    %52 = arith.maximumf %50, %51 : vector<8x128xf32>
    %53 = arith.truncf %52 : vector<8x128xf32> to vector<8x128xbf16>
    %c2_37 = arith.constant 2 : index
    %c1_38 = arith.constant 1 : index
    %c0_39 = arith.constant 0 : index
    %c0_40 = arith.constant 0 : index
    %54 = vector.load %arg2[%c2_37, %c1_38, %c0_39, %c0_40] : memref<3x2x128x128xbf16, #tpu.memory_space<vmem>>, vector<1x1x128x128xbf16>
    %55 = vector.shape_cast %54 : vector<1x1x128x128xbf16> to vector<128x128xbf16>
    %cst_41 = arith.constant dense<0.000000e+00> : vector<8x128xf32>
    %56 = tpu.matmul %53, %55, %cst_41 {dimension_numbers = #tpu.dot_dimension_numbers<[1], [0], [0], [1], [0, 0, 1, 1], [], []>} : vector<8x128xbf16>, vector<128x128xbf16>, vector<8x128xf32> -> vector<8x128xf32>
    %57 = vector.extract_strided_slice %5 {offsets = [5, 0], sizes = [1, 128], strides = [1, 1]} : vector<8x128xf32> to vector<1x128xf32>
    %58 = vector.broadcast %57 : vector<1x128xf32> to vector<8x128xf32>
    %59 = arith.addf %56, %58 : vector<8x128xf32>
    %60 = arith.addf %43, %59 : vector<8x128xf32>
    %c0_42 = arith.constant 0 : index
    %c0_43 = arith.constant 0 : index
    %61 = vector.load %arg4[%c0_42, %c0_43] : memref<8x128xbf16, #tpu.memory_space<vmem>>, vector<8x128xbf16>
    %62 = arith.truncf %60 : vector<8x128xf32> to vector<8x128xbf16>
    %cst_44 = arith.constant dense<0.000000e+00> : vector<8x8xf32>
    %63 = tpu.matmul %61, %62, %cst_44 {dimension_numbers = #tpu.dot_dimension_numbers<[1], [1], [0], [0], [0, 0, 1, 0], [], []>} : vector<8x128xbf16>, vector<8x128xbf16>, vector<8x8xf32> -> vector<8x8xf32>
    %c0_45 = arith.constant 0 : index
    %c0_46 = arith.constant 0 : index
    %64 = vector.load %arg5[%c0_45, %c0_46] : memref<8x8xf32, #tpu.memory_space<vmem>>, vector<8x8xf32>
    tpu.vector_store %arg5[%c0_45, %c0_46], %63 {strides = array<i32>} : memref<8x8xf32, #tpu.memory_space<vmem>>, vector<8x8xf32>,
    return
  }
  func.func @transform_0(%arg0: i32) -> (i32, i32) {
    %c0_i32 = arith.constant 0 : i32
    %c0_i32_0 = arith.constant 0 : i32
    return %arg0, %c0_i32 : i32, i32
  }
  func.func @transform_1(%arg0: i32) -> (i32, i32, i32, i32) {
    %c0_i32 = arith.constant 0 : i32
    %c0_i32_0 = arith.constant 0 : i32
    %c0_i32_1 = arith.constant 0 : i32
    %c0_i32_2 = arith.constant 0 : i32
    %c0_i32_3 = arith.constant 0 : i32
    return %c0_i32, %c0_i32_0, %c0_i32_1, %c0_i32_2 : i32, i32, i32, i32
  }
  func.func @transform_2(%arg0: i32) -> (i32, i32) {
    %c0_i32 = arith.constant 0 : i32
    %c0_i32_0 = arith.constant 0 : i32
    %c0_i32_1 = arith.constant 0 : i32
    return %c0_i32, %c0_i32_0 : i32, i32
  }
  func.func @transform_3(%arg0: i32) -> (i32, i32) {
    %c0_i32 = arith.constant 0 : i32
    %c0_i32_0 = arith.constant 0 : i32
    %c0_i32_1 = arith.constant 0 : i32
    return %c0_i32, %c0_i32_0 : i32, i32
  }
  func.func @transform_4(%arg0: i32) -> (i32, i32) {
    %c0_i32 = arith.constant 0 : i32
    %c0_i32_0 = arith.constant 0 : i32
    return %c0_i32, %arg0 : i32, i32
  }
}

</mosaic_0001>

<llo_original>
// kernel: tpu_custom_call.1
$region0: #{tpu_custom_call.1}
  #allocation0 [shape = 'u32[]', space=smem, size = 0x4, offset = 0x4, fixed_abs, tag = 'smem constant byte address 0x4 - core index']
  #allocation1 [shape = 'u32[144,128]{1,0:T(1,128)}', space=vmem, size = 0x12000, scoped, tag = 'internal scratch']
  #allocation2 [shape = 'f32[8,128]{1,0:T(8,128)}', space=vmem, size = 0x1000, scoped, tag = 'scratch operand']
  %s0 = inlined_call_operand.hbm [shape: f32[8,32], index: 0, kind: input, shape index: {}]
  %s1 = inlined_call_operand.hbm [shape: bf16[3,2,128,128], index: 1, kind: input, shape index: {}]
  %s2 = inlined_call_operand.hbm [shape: f32[8,128], index: 2, kind: input, shape index: {}]
  %s3 = inlined_call_operand.vmem [shape: bf16[8,128], index: 3, kind: input, shape index: {}]
  %s4 = inlined_call_operand.hbm [shape: f32[8,8], index: 4, kind: output, shape index: {}]
  %s5 = sld [smem:[#allocation0]]
  $region38: #{tpu_custom_call.1} parent=0
    _
  %s7 = ssub.s32 1, %s5
  %s8 = scalar_select 0, %s7, %s5
  $region1: #{tpu_custom_call.1} parent=0
    #allocation3 [shape = 'u8[4096]{0}', space=vmem, size = 0x1000, scoped, tag = 'input window, operand 0, single buffered']
    #allocation4 [shape = 's32[1]{0}', space=sflag, size = 0x4, scoped, tag = 'scoped memory for tpu_custom_call.1']
    #allocation5 [shape = 's32[1]{0}', space=sflag, size = 0x4, scoped, tag = 'scoped memory for tpu_custom_call.1']
    #allocation6 [shape = 'u8[196608]{0}', space=vmem, size = 0x30000, scoped, tag = 'input window, operand 1, single buffered']
    #allocation7 [shape = 's32[1]{0}', space=sflag, size = 0x4, scoped, tag = 'scoped memory for tpu_custom_call.1']
    #allocation8 [shape = 'u8[4096]{0}', space=vmem, size = 0x1000, scoped, tag = 'input window, operand 2, single buffered']
    #allocation9 [shape = 'u8[4096]{0}', space=vmem, size = 0x1000, scoped, tag = 'output window, operand 0, single buffered']
    %9 = vsyncpa [#allocation4], 0
    %10 = vsyncpa [#allocation7], 0
    %11 = vsyncpa [#allocation5], 0
    // Predicated region
    $region2: #{tpu_custom_call.1} parent=1 // pred_check
      _
    $region3: #{tpu_custom_call.1} parent=1 // pred_check_branch
      %13 = sbr.rel (0) target = $region5
    $region4: #{tpu_custom_call.1} parent=1 // pred_region
      %s15 = ssub.s32 128, 128
      %16 = vsyncadd [#allocation4], %s15
      %s18 = sshll.u32 [#allocation3], 4
      %s19 = int_to_ptr.vmem [resolvable:$true] %s18
      %21 = dma.hbm_to_vmem [thread:$0]  %s0, 128, %s19, [#allocation4]
    $region5: #{tpu_custom_call.1} parent=1 // pred_fallthru
      _
    // Predicated region
    $region6: #{tpu_custom_call.1} parent=1 // pred_check
      _
    $region7: #{tpu_custom_call.1} parent=1 // pred_check_branch
      %23 = sbr.rel (0) target = $region9
    $region8: #{tpu_custom_call.1} parent=1 // pred_region
      %s25 = ssub.s32 6144, 6144
      %26 = vsyncadd [#allocation7], %s25
      %s27 = sshll.u32 [#allocation6], 4
      %s28 = int_to_ptr.vmem [resolvable:$true] %s27
      %33 = dma.hbm_to_vmem [thread:$0]  %s1, 6144, %s28, [#allocation7], 64, 64, 4
    $region9: #{tpu_custom_call.1} parent=1 // pred_fallthru
      _
    // Predicated region
    $region10: #{tpu_custom_call.1} parent=1 // pred_check
      _
    $region11: #{tpu_custom_call.1} parent=1 // pred_check_branch
      %35 = sbr.rel (0) target = $region13
    $region12: #{tpu_custom_call.1} parent=1 // pred_region
      %s37 = ssub.s32 128, 128
      %38 = vsyncadd [#allocation7], %s37
      %s40 = sshll.u32 [#allocation8], 4
      %s41 = int_to_ptr.vmem [resolvable:$true] %s40
      %43 = dma.hbm_to_vmem [thread:$0]  %s2, 128, %s41, [#allocation7]
    $region13: #{tpu_custom_call.1} parent=1 // pred_fallthru
      _
    // Predicated region
    $region14: #{tpu_custom_call.1} parent=1 // pred_check
      _
    $region15: #{tpu_custom_call.1} parent=1 // pred_check_branch
      %45 = sbr.rel (0) target = $region17
    $region16: #{tpu_custom_call.1} parent=1 // pred_region
      _
    $region17: #{tpu_custom_call.1} parent=1 // pred_fallthru
      _
    // Predicated region
    $region18: #{tpu_custom_call.1} parent=1 // pred_check
      _
    $region19: #{tpu_custom_call.1} parent=1 // pred_check_branch
      %47 = sbr.rel (0) target = $region21
    $region20: #{tpu_custom_call.1} parent=1 // pred_region
      %48 = dma.done [#allocation4], 128
    $region21: #{tpu_custom_call.1} parent=1 // pred_fallthru
      _
    // Predicated region
    $region22: #{tpu_custom_call.1} parent=1 // pred_check
      _
    $region23: #{tpu_custom_call.1} parent=1 // pred_check_branch
      %50 = sbr.rel (0) target = $region25
    $region24: #{tpu_custom_call.1} parent=1 // pred_region
      %51 = dma.done [#allocation7], 6144
    $region25: #{tpu_custom_call.1} parent=1 // pred_fallthru
      _
    // Predicated region
    $region26: #{tpu_custom_call.1} parent=1 // pred_check
      _
    $region27: #{tpu_custom_call.1} parent=1 // pred_check_branch
      %53 = sbr.rel (0) target = $region29
    $region28: #{tpu_custom_call.1} parent=1 // pred_region
      %54 = dma.done [#allocation7], 128
    $region29: #{tpu_custom_call.1} parent=1 // pred_fallthru
      _
    %56 = vst [vmem:[#allocation2] sm:$0xff] 0.0
    %v57 = vld [vmem:[#allocation3] sm:$0xff]
    %vm58 = vcmask 261120
    %59 = vst.msk [vmem:[#allocation2] sm:$0xff] %vm58, %v57
    %v60 = vld [vmem:[#allocation2] sm:$0xff]
    %v61 = vld [vmem:[#allocation8] sm:$0xff]
    %v62 = vpack.c.bf16 %v60, %v60
    %v63 = vld [vmem:[#allocation6] sm:$0xf]
    %v64 = vld [vmem:[#allocation6 + $0x4] sm:$0xf]
    %v65 = vld [vmem:[#allocation6 + $0x8] sm:$0xf]
    %v66 = vld [vmem:[#allocation6 + $0xc] sm:$0xf]
    %v67 = vld [vmem:[#allocation6 + $0x10] sm:$0xf]
    %v68 = vld [vmem:[#allocation6 + $0x14] sm:$0xf]
    %v69 = vld [vmem:[#allocation6 + $0x18] sm:$0xf]
    %v70 = vld [vmem:[#allocation6 + $0x1c] sm:$0xf]
    %v71 = vld [vmem:[#allocation6 + $0x20] sm:$0xf]
    %v72 = vld [vmem:[#allocation6 + $0x24] sm:$0xf]
    %v73 = vld [vmem:[#allocation6 + $0x28] sm:$0xf]
    %v74 = vld [vmem:[#allocation6 + $0x2c] sm:$0xf]
    %v75 = vld [vmem:[#allocation6 + $0x30] sm:$0xf]
    %v76 = vld [vmem:[#allocation6 + $0x34] sm:$0xf]
    %v77 = vld [vmem:[#allocation6 + $0x38] sm:$0xf]
    %v78 = vld [vmem:[#allocation6 + $0x3c] sm:$0xf]
    %v79 = vlaneseq
    %v80 = vshrl.u32 %v79, 7
    %v81 = vsub.s32 0, %v80
    %v82 = vrot.slane %v61, %v81
    %v99 = vunpack.c.l.b16 %v63
    %v100 = vunpack.c.l.b16 %v64
    %v101 = vunpack.c.l.b16 %v65
    %v102 = vunpack.c.l.b16 %v66
    %v103 = vunpack.c.l.b16 %v67
    %v104 = vunpack.c.l.b16 %v68
    %v105 = vunpack.c.l.b16 %v69
    %v106 = vunpack.c.l.b16 %v70
    %v107 = vunpack.c.l.b16 %v71
    %v108 = vunpack.c.l.b16 %v72
    %v109 = vunpack.c.l.b16 %v73
    %v110 = vunpack.c.l.b16 %v74
    %v111 = vunpack.c.l.b16 %v75
    %v112 = vunpack.c.l.b16 %v76
    %v113 = vunpack.c.l.b16 %v77
    %v114 = vunpack.c.l.b16 %v78
    %v115 = vpack.c.b16 %v100, %v99
    %v116 = vpack.c.b16 %v102, %v101
    %v117 = vpack.c.b16 %v104, %v103
    %v118 = vpack.c.b16 %v106, %v105
    %v119 = vpack.c.b16 %v108, %v107
    %v120 = vpack.c.b16 %v110, %v109
    %v121 = vpack.c.b16 %v112, %v111
    %v122 = vpack.c.b16 %v114, %v113
    %131 = vmatprep.subr.bf16.mxu0 0
    %132 = vmatpush1.bf16.msra.mxu0 %v115
    %133 = vmatprep.subr.bf16.mxu0 0
    %134 = vmatpush1.bf16.msra.mxu0 %v116
    %135 = vmatprep.subr.bf16.mxu0 0
    %136 = vmatpush1.bf16.msra.mxu0 %v117
    %137 = vmatprep.subr.bf16.mxu0 0
    %138 = vmatpush1.bf16.msra.mxu0 %v118
    %139 = vmatprep.subr.bf16.mxu0 0
    %140 = vmatpush1.bf16.msra.mxu0 %v119
    %141 = vmatprep.subr.bf16.mxu0 0
    %142 = vmatpush1.bf16.msra.mxu0 %v120
    %143 = vmatprep.subr.bf16.mxu0 0
    %144 = vmatpush1.bf16.msra.mxu0 %v121
    %145 = vmatprep.subr.bf16.mxu0 0
    %146 = vmatpush1.bf16.msra.mxu0 %v122
    %147 = vmatprep.subr.bf16.mxu0 0
    %148 = vmatpush1.bf16.msra.mxu0 0
    %149 = vmatprep.subr.bf16.mxu0 0
    %150 = vmatpush1.bf16.msra.mxu0 0
    %151 = vmatprep.subr.bf16.mxu0 0
    %152 = vmatpush1.bf16.msra.mxu0 0
    %153 = vmatprep.subr.bf16.mxu0 0
    %154 = vmatpush1.bf16.msra.mxu0 0
    %155 = vmatprep.subr.bf16.mxu0 0
    %156 = vmatpush1.bf16.msra.mxu0 0
    %157 = vmatprep.subr.bf16.mxu0 0
    %158 = vmatpush1.bf16.msra.mxu0 0
    %159 = vmatprep.subr.bf16.mxu0 0
    %160 = vmatpush1.bf16.msra.mxu0 0
    %161 = vmatprep.subr.bf16.mxu0 0
    %162 = vmatpush1.bf16.msra.mxu0 0
    %163 = vmatprep.mubr.bf16.mxu0 0
    %164 = vmatmul.mubr.bf16.gmra.mrb[0].mxu0 %v62
    %v165 = vpop.f32.mrb[0].mxu0
    %v166 = vadd.f32 %v82, %v165
    %v167 = vpop.f32.mrb[0].mxu0
    %v168 = vpop.f32.mrb[0].mxu0
    %v169 = vpop.f32.mrb[0].mxu0
    %170 = vdwg.mxu0
    %v171 = vmax.f32 %v166, 0.0
    %v172 = vpack.c.bf16 %v171, %v171
    %s173 = scalar_lea.vmem [#allocation6], 64
    %v174 = vld [vmem:[%s173] sm:$0xf]
    %v175 = vld [vmem:[%s173 + $0x4] sm:$0xf]
    %v176 = vld [vmem:[%s173 + $0x8] sm:$0xf]
    %v177 = vld [vmem:[%s173 + $0xc] sm:$0xf]
    %v178 = vld [vmem:[%s173 + $0x10] sm:$0xf]
    %v179 = vld [vmem:[%s173 + $0x14] sm:$0xf]
    %v180 = vld [vmem:[%s173 + $0x18] sm:$0xf]
    %v181 = vld [vmem:[%s173 + $0x1c] sm:$0xf]
    %v182 = vld [vmem:[%s173 + $0x20] sm:$0xf]
    %v183 = vld [vmem:[%s173 + $0x24] sm:$0xf]
    %v184 = vld [vmem:[%s173 + $0x28] sm:$0xf]
    %v185 = vld [vmem:[%s173 + $0x2c] sm:$0xf]
    %v186 = vld [vmem:[%s173 + $0x30] sm:$0xf]
    %v187 = vld [vmem:[%s173 + $0x34] sm:$0xf]
    %v188 = vld [vmem:[%s173 + $0x38] sm:$0xf]
    %v189 = vld [vmem:[%s173 + $0x3c] sm:$0xf]
    %v190 = vlaneseq
    %v191 = vshrl.u32 %v190, 7
    %v192 = vsub.s32 1, %v191
    %v193 = vrot.slane %v61, %v192
    %v210 = vunpack.c.l.b16 %v174
    %v211 = vunpack.c.l.b16 %v175
    %v212 = vunpack.c.l.b16 %v176
    %v213 = vunpack.c.l.b16 %v177
    %v214 = vunpack.c.l.b16 %v178
    %v215 = vunpack.c.l.b16 %v179
    %v216 = vunpack.c.l.b16 %v180
    %v217 = vunpack.c.l.b16 %v181
    %v218 = vunpack.c.l.b16 %v182
    %v219 = vunpack.c.l.b16 %v183
    %v220 = vunpack.c.l.b16 %v184
    %v221 = vunpack.c.l.b16 %v185
    %v222 = vunpack.c.l.b16 %v186
    %v223 = vunpack.c.l.b16 %v187
    %v224 = vunpack.c.l.b16 %v188
    %v225 = vunpack.c.l.b16 %v189
    %v226 = vpack.c.b16 %v211, %v210
    %v227 = vpack.c.b16 %v213, %v212
    %v228 = vpack.c.b16 %v215, %v214
    %v229 = vpack.c.b16 %v217, %v216
    %v230 = vpack.c.b16 %v219, %v218
    %v231 = vpack.c.b16 %v221, %v220
    %v232 = vpack.c.b16 %v223, %v222
    %v233 = vpack.c.b16 %v225, %v224
    %242 = vmatprep.subr.bf16.mxu0 0
    %243 = vmatpush1.bf16.msra.mxu0 %v226
    %244 = vmatprep.subr.bf16.mxu0 0
    %245 = vmatpush1.bf16.msra.mxu0 %v227
    %246 = vmatprep.subr.bf16.mxu0 0
    %247 = vmatpush1.bf16.msra.mxu0 %v228
    %248 = vmatprep.subr.bf16.mxu0 0
    %249 = vmatpush1.bf16.msra.mxu0 %v229
    %250 = vmatprep.subr.bf16.mxu0 0
    %251 = vmatpush1.bf16.msra.mxu0 %v230
    %252 = vmatprep.subr.bf16.mxu0 0
    %253 = vmatpush1.bf16.msra.mxu0 %v231
    %254 = vmatprep.subr.bf16.mxu0 0
    %255 = vmatpush1.bf16.msra.mxu0 %v232
    %256 = vmatprep.subr.bf16.mxu0 0
    %257 = vmatpush1.bf16.msra.mxu0 %v233
    %258 = vmatprep.subr.bf16.mxu0 0
    %259 = vmatpush1.bf16.msra.mxu0 0
    %260 = vmatprep.subr.bf16.mxu0 0
    %261 = vmatpush1.bf16.msra.mxu0 0
    %262 = vmatprep.subr.bf16.mxu0 0
    %263 = vmatpush1.bf16.msra.mxu0 0
    %264 = vmatprep.subr.bf16.mxu0 0
    %265 = vmatpush1.bf16.msra.mxu0 0
    %266 = vmatprep.subr.bf16.mxu0 0
    %267 = vmatpush1.bf16.msra.mxu0 0
    %268 = vmatprep.subr.bf16.mxu0 0
    %269 = vmatpush1.bf16.msra.mxu0 0
    %270 = vmatprep.subr.bf16.mxu0 0
    %271 = vmatpush1.bf16.msra.mxu0 0
    %272 = vmatprep.subr.bf16.mxu0 0
    %273 = vmatpush1.bf16.msra.mxu0 0
    %274 = vmatprep.mubr.bf16.mxu0 0
    %275 = vmatmul.mubr.bf16.gmra.mrb[0].mxu0 %v172
    %v276 = vpop.f32.mrb[0].mxu0
    %v277 = vadd.f32 %v193, %v276
    %v278 = vpop.f32.mrb[0].mxu0
    %v279 = vpop.f32.mrb[0].mxu0
    %v280 = vpop.f32.mrb[0].mxu0
    %281 = vdwg.mxu0
    %v282 = vadd.f32 %v60, %v277
    %v283 = vmax.f32 %v282, 0.0
    %v284 = vpack.c.bf16 %v283, %v283
    %s285 = scalar_lea.vmem [#allocation6], 128
    %v286 = vld [vmem:[%s285] sm:$0xf]
    %v287 = vld [vmem:[%s285 + $0x4] sm:$0xf]
    %v288 = vld [vmem:[%s285 + $0x8] sm:$0xf]
    %v289 = vld [vmem:[%s285 + $0xc] sm:$0xf]
    %v290 = vld [vmem:[%s285 + $0x10] sm:$0xf]
    %v291 = vld [vmem:[%s285 + $0x14] sm:$0xf]
    %v292 = vld [vmem:[%s285 + $0x18] sm:$0xf]
    %v293 = vld [vmem:[%s285 + $0x1c] sm:$0xf]
    %v294 = vld [vmem:[%s285 + $0x20] sm:$0xf]
    %v295 = vld [vmem:[%s285 + $0x24] sm:$0xf]
    %v296 = vld [vmem:[%s285 + $0x28] sm:$0xf]
    %v297 = vld [vmem:[%s285 + $0x2c] sm:$0xf]
    %v298 = vld [vmem:[%s285 + $0x30] sm:$0xf]
    %v299 = vld [vmem:[%s285 + $0x34] sm:$0xf]
    %v300 = vld [vmem:[%s285 + $0x38] sm:$0xf]
    %v301 = vld [vmem:[%s285 + $0x3c] sm:$0xf]
    %v302 = vlaneseq
    %v303 = vshrl.u32 %v302, 7
    %v304 = vsub.s32 2, %v303
    %v305 = vrot.slane %v61, %v304
    %v322 = vunpack.c.l.b16 %v286
    %v323 = vunpack.c.l.b16 %v287
    %v324 = vunpack.c.l.b16 %v288
    %v325 = vunpack.c.l.b16 %v289
    %v326 = vunpack.c.l.b16 %v290
    %v327 = vunpack.c.l.b16 %v291
    %v328 = vunpack.c.l.b16 %v292
    %v329 = vunpack.c.l.b16 %v293
    %v330 = vunpack.c.l.b16 %v294
    %v331 = vunpack.c.l.b16 %v295
    %v332 = vunpack.c.l.b16 %v296
    %v333 = vunpack.c.l.b16 %v297
    %v334 = vunpack.c.l.b16 %v298
    %v335 = vunpack.c.l.b16 %v299
    %v336 = vunpack.c.l.b16 %v300
    %v337 = vunpack.c.l.b16 %v301
    %v338 = vpack.c.b16 %v323, %v322
    %v339 = vpack.c.b16 %v325, %v324
    %v340 = vpack.c.b16 %v327, %v326
    %v341 = vpack.c.b16 %v329, %v328
    %v342 = vpack.c.b16 %v331, %v330
    %v343 = vpack.c.b16 %v333, %v332
    %v344 = vpack.c.b16 %v335, %v334
    %v345 = vpack.c.b16 %v337, %v336
    %354 = vmatprep.subr.bf16.mxu0 0
    %355 = vmatpush1.bf16.msra.mxu0 %v338
    %356 = vmatprep.subr.bf16.mxu0 0
    %357 = vmatpush1.bf16.msra.mxu0 %v339
    %358 = vmatprep.subr.bf16.mxu0 0
    %359 = vmatpush1.bf16.msra.mxu0 %v340
    %360 = vmatprep.subr.bf16.mxu0 0
    %361 = vmatpush1.bf16.msra.mxu0 %v341
    %362 = vmatprep.subr.bf16.mxu0 0
    %363 = vmatpush1.bf16.msra.mxu0 %v342
    %364 = vmatprep.subr.bf16.mxu0 0
    %365 = vmatpush1.bf16.msra.mxu0 %v343
    %366 = vmatprep.subr.bf16.mxu0 0
    %367 = vmatpush1.bf16.msra.mxu0 %v344
    %368 = vmatprep.subr.bf16.mxu0 0
    %369 = vmatpush1.bf16.msra.mxu0 %v345
    %370 = vmatprep.subr.bf16.mxu0 0
    %371 = vmatpush1.bf16.msra.mxu0 0
    %372 = vmatprep.subr.bf16.mxu0 0
    %373 = vmatpush1.bf16.msra.mxu0 0
    %374 = vmatprep.subr.bf16.mxu0 0
    %375 = vmatpush1.bf16.msra.mxu0 0
    %376 = vmatprep.subr.bf16.mxu0 0
    %377 = vmatpush1.bf16.msra.mxu0 0
    %378 = vmatprep.subr.bf16.mxu0 0
    %379 = vmatpush1.bf16.msra.mxu0 0
    %380 = vmatprep.subr.bf16.mxu0 0
    %381 = vmatpush1.bf16.msra.mxu0 0
    %382 = vmatprep.subr.bf16.mxu0 0
    %383 = vmatpush1.bf16.msra.mxu0 0
    %384 = vmatprep.subr.bf16.mxu0 0
    %385 = vmatpush1.bf16.msra.mxu0 0
    %386 = vmatprep.mubr.bf16.mxu0 0
    %387 = vmatmul.mubr.bf16.gmra.mrb[0].mxu0 %v284
    %v388 = vpop.f32.mrb[0].mxu0
    %v389 = vadd.f32 %v305, %v388
    %v390 = vpop.f32.mrb[0].mxu0
    %v391 = vpop.f32.mrb[0].mxu0
    %v392 = vpop.f32.mrb[0].mxu0
    %393 = vdwg.mxu0
    %v394 = vmax.f32 %v389, 0.0
    %v395 = vpack.c.bf16 %v394, %v394
    %s396 = scalar_lea.vmem [#allocation6], 192
    %v397 = vld [vmem:[%s396] sm:$0xf]
    %v398 = vld [vmem:[%s396 + $0x4] sm:$0xf]
    %v399 = vld [vmem:[%s396 + $0x8] sm:$0xf]
    %v400 = vld [vmem:[%s396 + $0xc] sm:$0xf]
    %v401 = vld [vmem:[%s396 + $0x10] sm:$0xf]
    %v402 = vld [vmem:[%s396 + $0x14] sm:$0xf]
    %v403 = vld [vmem:[%s396 + $0x18] sm:$0xf]
    %v404 = vld [vmem:[%s396 + $0x1c] sm:$0xf]
    %v405 = vld [vmem:[%s396 + $0x20] sm:$0xf]
    %v406 = vld [vmem:[%s396 + $0x24] sm:$0xf]
    %v407 = vld [vmem:[%s396 + $0x28] sm:$0xf]
    %v408 = vld [vmem:[%s396 + $0x2c] sm:$0xf]
    %v409 = vld [vmem:[%s396 + $0x30] sm:$0xf]
    %v410 = vld [vmem:[%s396 + $0x34] sm:$0xf]
    %v411 = vld [vmem:[%s396 + $0x38] sm:$0xf]
    %v412 = vld [vmem:[%s396 + $0x3c] sm:$0xf]
    %v413 = vlaneseq
    %v414 = vshrl.u32 %v413, 7
    %v415 = vsub.s32 3, %v414
    %v416 = vrot.slane %v61, %v415
    %v433 = vunpack.c.l.b16 %v397
    %v434 = vunpack.c.l.b16 %v398
    %v435 = vunpack.c.l.b16 %v399
    %v436 = vunpack.c.l.b16 %v400
    %v437 = vunpack.c.l.b16 %v401
    %v438 = vunpack.c.l.b16 %v402
    %v439 = vunpack.c.l.b16 %v403
    %v440 = vunpack.c.l.b16 %v404
    %v441 = vunpack.c.l.b16 %v405
    %v442 = vunpack.c.l.b16 %v406
    %v443 = vunpack.c.l.b16 %v407
    %v444 = vunpack.c.l.b16 %v408
    %v445 = vunpack.c.l.b16 %v409
    %v446 = vunpack.c.l.b16 %v410
    %v447 = vunpack.c.l.b16 %v411
    %v448 = vunpack.c.l.b16 %v412
    %v449 = vpack.c.b16 %v434, %v433
    %v450 = vpack.c.b16 %v436, %v435
    %v451 = vpack.c.b16 %v438, %v437
    %v452 = vpack.c.b16 %v440, %v439
    %v453 = vpack.c.b16 %v442, %v441
    %v454 = vpack.c.b16 %v444, %v443
    %v455 = vpack.c.b16 %v446, %v445
    %v456 = vpack.c.b16 %v448, %v447
    %465 = vmatprep.subr.bf16.mxu0 0
    %466 = vmatpush1.bf16.msra.mxu0 %v449
    %467 = vmatprep.subr.bf16.mxu0 0
    %468 = vmatpush1.bf16.msra.mxu0 %v450
    %469 = vmatprep.subr.bf16.mxu0 0
    %470 = vmatpush1.bf16.msra.mxu0 %v451
    %471 = vmatprep.subr.bf16.mxu0 0
    %472 = vmatpush1.bf16.msra.mxu0 %v452
    %473 = vmatprep.subr.bf16.mxu0 0
    %474 = vmatpush1.bf16.msra.mxu0 %v453
    %475 = vmatprep.subr.bf16.mxu0 0
    %476 = vmatpush1.bf16.msra.mxu0 %v454
    %477 = vmatprep.subr.bf16.mxu0 0
    %478 = vmatpush1.bf16.msra.mxu0 %v455
    %479 = vmatprep.subr.bf16.mxu0 0
    %480 = vmatpush1.bf16.msra.mxu0 %v456
    %481 = vmatprep.subr.bf16.mxu0 0
    %482 = vmatpush1.bf16.msra.mxu0 0
    %483 = vmatprep.subr.bf16.mxu0 0
    %484 = vmatpush1.bf16.msra.mxu0 0
    %485 = vmatprep.subr.bf16.mxu0 0
    %486 = vmatpush1.bf16.msra.mxu0 0
    %487 = vmatprep.subr.bf16.mxu0 0
    %488 = vmatpush1.bf16.msra.mxu0 0
    %489 = vmatprep.subr.bf16.mxu0 0
    %490 = vmatpush1.bf16.msra.mxu0 0
    %491 = vmatprep.subr.bf16.mxu0 0
    %492 = vmatpush1.bf16.msra.mxu0 0
    %493 = vmatprep.subr.bf16.mxu0 0
    %494 = vmatpush1.bf16.msra.mxu0 0
    %495 = vmatprep.subr.bf16.mxu0 0
    %496 = vmatpush1.bf16.msra.mxu0 0
    %497 = vmatprep.mubr.bf16.mxu0 0
    %498 = vmatmul.mubr.bf16.gmra.mrb[0].mxu0 %v395
    %v499 = vpop.f32.mrb[0].mxu0
    %v500 = vadd.f32 %v416, %v499
    %v501 = vpop.f32.mrb[0].mxu0
    %v502 = vpop.f32.mrb[0].mxu0
    %v503 = vpop.f32.mrb[0].mxu0
    %504 = vdwg.mxu0
    %v505 = vadd.f32 %v283, %v500
    %v506 = vmax.f32 %v505, 0.0
    %v507 = vpack.c.bf16 %v506, %v506
    %s508 = scalar_lea.vmem [#allocation6], 256
    %v509 = vld [vmem:[%s508] sm:$0xf]
    %v510 = vld [vmem:[%s508 + $0x4] sm:$0xf]
    %v511 = vld [vmem:[%s508 + $0x8] sm:$0xf]
    %v512 = vld [vmem:[%s508 + $0xc] sm:$0xf]
    %v513 = vld [vmem:[%s508 + $0x10] sm:$0xf]
    %v514 = vld [vmem:[%s508 + $0x14] sm:$0xf]
    %v515 = vld [vmem:[%s508 + $0x18] sm:$0xf]
    %v516 = vld [vmem:[%s508 + $0x1c] sm:$0xf]
    %v517 = vld [vmem:[%s508 + $0x20] sm:$0xf]
    %v518 = vld [vmem:[%s508 + $0x24] sm:$0xf]
    %v519 = vld [vmem:[%s508 + $0x28] sm:$0xf]
    %v520 = vld [vmem:[%s508 + $0x2c] sm:$0xf]
    %v521 = vld [vmem:[%s508 + $0x30] sm:$0xf]
    %v522 = vld [vmem:[%s508 + $0x34] sm:$0xf]
    %v523 = vld [vmem:[%s508 + $0x38] sm:$0xf]
    %v524 = vld [vmem:[%s508 + $0x3c] sm:$0xf]
    %v525 = vlaneseq
    %v526 = vshrl.u32 %v525, 7
    %v527 = vsub.s32 4, %v526
    %v528 = vrot.slane %v61, %v527
    %v545 = vunpack.c.l.b16 %v509
    %v546 = vunpack.c.l.b16 %v510
    %v547 = vunpack.c.l.b16 %v511
    %v548 = vunpack.c.l.b16 %v512
    %v549 = vunpack.c.l.b16 %v513
    %v550 = vunpack.c.l.b16 %v514
    %v551 = vunpack.c.l.b16 %v515
    %v552 = vunpack.c.l.b16 %v516
    %v553 = vunpack.c.l.b16 %v517
    %v554 = vunpack.c.l.b16 %v518
    %v555 = vunpack.c.l.b16 %v519
    %v556 = vunpack.c.l.b16 %v520
    %v557 = vunpack.c.l.b16 %v521
    %v558 = vunpack.c.l.b16 %v522
    %v559 = vunpack.c.l.b16 %v523
    %v560 = vunpack.c.l.b16 %v524
    %v561 = vpack.c.b16 %v546, %v545
    %v562 = vpack.c.b16 %v548, %v547
    %v563 = vpack.c.b16 %v550, %v549
    %v564 = vpack.c.b16 %v552, %v551
    %v565 = vpack.c.b16 %v554, %v553
    %v566 = vpack.c.b16 %v556, %v555
    %v567 = vpack.c.b16 %v558, %v557
    %v568 = vpack.c.b16 %v560, %v559
    %577 = vmatprep.subr.bf16.mxu0 0
    %578 = vmatpush1.bf16.msra.mxu0 %v561
    %579 = vmatprep.subr.bf16.mxu0 0
    %580 = vmatpush1.bf16.msra.mxu0 %v562
    %581 = vmatprep.subr.bf16.mxu0 0
    %582 = vmatpush1.bf16.msra.mxu0 %v563
    %583 = vmatprep.subr.bf16.mxu0 0
    %584 = vmatpush1.bf16.msra.mxu0 %v564
    %585 = vmatprep.subr.bf16.mxu0 0
    %586 = vmatpush1.bf16.msra.mxu0 %v565
    %587 = vmatprep.subr.bf16.mxu0 0
    %588 = vmatpush1.bf16.msra.mxu0 %v566
    %589 = vmatprep.subr.bf16.mxu0 0
    %590 = vmatpush1.bf16.msra.mxu0 %v567
    %591 = vmatprep.subr.bf16.mxu0 0
    %592 = vmatpush1.bf16.msra.mxu0 %v568
    %593 = vmatprep.subr.bf16.mxu0 0
    %594 = vmatpush1.bf16.msra.mxu0 0
    %595 = vmatprep.subr.bf16.mxu0 0
    %596 = vmatpush1.bf16.msra.mxu0 0
    %597 = vmatprep.subr.bf16.mxu0 0
    %598 = vmatpush1.bf16.msra.mxu0 0
    %599 = vmatprep.subr.bf16.mxu0 0
    %600 = vmatpush1.bf16.msra.mxu0 0
    %601 = vmatprep.subr.bf16.mxu0 0
    %602 = vmatpush1.bf16.msra.mxu0 0
    %603 = vmatprep.subr.bf16.mxu0 0
    %604 = vmatpush1.bf16.msra.mxu0 0
    %605 = vmatprep.subr.bf16.mxu0 0
    %606 = vmatpush1.bf16.msra.mxu0 0
    %607 = vmatprep.subr.bf16.mxu0 0
    %608 = vmatpush1.bf16.msra.mxu0 0
    %609 = vmatprep.mubr.bf16.mxu0 0
    %610 = vmatmul.mubr.bf16.gmra.mrb[0].mxu0 %v507
    %v611 = vpop.f32.mrb[0].mxu0
    %v612 = vadd.f32 %v528, %v611
    %v613 = vpop.f32.mrb[0].mxu0
    %v614 = vpop.f32.mrb[0].mxu0
    %v615 = vpop.f32.mrb[0].mxu0
    %616 = vdwg.mxu0
    %v617 = vmax.f32 %v612, 0.0
    %v618 = vpack.c.bf16 %v617, %v617
    %s619 = scalar_lea.vmem [#allocation6], 320
    %v620 = vld [vmem:[%s619] sm:$0xf]
    %v621 = vld [vmem:[%s619 + $0x4] sm:$0xf]
    %v622 = vld [vmem:[%s619 + $0x8] sm:$0xf]
    %v623 = vld [vmem:[%s619 + $0xc] sm:$0xf]
    %v624 = vld [vmem:[%s619 + $0x10] sm:$0xf]
    %v625 = vld [vmem:[%s619 + $0x14] sm:$0xf]
    %v626 = vld [vmem:[%s619 + $0x18] sm:$0xf]
    %v627 = vld [vmem:[%s619 + $0x1c] sm:$0xf]
    %v628 = vld [vmem:[%s619 + $0x20] sm:$0xf]
    %v629 = vld [vmem:[%s619 + $0x24] sm:$0xf]
    %v630 = vld [vmem:[%s619 + $0x28] sm:$0xf]
    %v631 = vld [vmem:[%s619 + $0x2c] sm:$0xf]
    %v632 = vld [vmem:[%s619 + $0x30] sm:$0xf]
    %v633 = vld [vmem:[%s619 + $0x34] sm:$0xf]
    %v634 = vld [vmem:[%s619 + $0x38] sm:$0xf]
    %v635 = vld [vmem:[%s619 + $0x3c] sm:$0xf]
    %v636 = vlaneseq
    %v637 = vshrl.u32 %v636, 7
    %v638 = vsub.s32 5, %v637
    %v639 = vrot.slane %v61, %v638
    %v656 = vunpack.c.l.b16 %v620
    %v657 = vunpack.c.l.b16 %v621
    %v658 = vunpack.c.l.b16 %v622
    %v659 = vunpack.c.l.b16 %v623
    %v660 = vunpack.c.l.b16 %v624
    %v661 = vunpack.c.l.b16 %v625
    %v662 = vunpack.c.l.b16 %v626
    %v663 = vunpack.c.l.b16 %v627
    %v664 = vunpack.c.l.b16 %v628
    %v665 = vunpack.c.l.b16 %v629
    %v666 = vunpack.c.l.b16 %v630
    %v667 = vunpack.c.l.b16 %v631
    %v668 = vunpack.c.l.b16 %v632
    %v669 = vunpack.c.l.b16 %v633
    %v670 = vunpack.c.l.b16 %v634
    %v671 = vunpack.c.l.b16 %v635
    %v672 = vpack.c.b16 %v657, %v656
    %v673 = vpack.c.b16 %v659, %v658
    %v674 = vpack.c.b16 %v661, %v660
    %v675 = vpack.c.b16 %v663, %v662
    %v676 = vpack.c.b16 %v665, %v664
    %v677 = vpack.c.b16 %v667, %v666
    %v678 = vpack.c.b16 %v669, %v668
    %v679 = vpack.c.b16 %v671, %v670
    %688 = vmatprep.subr.bf16.mxu0 0
    %689 = vmatpush1.bf16.msra.mxu0 %v672
    %690 = vmatprep.subr.bf16.mxu0 0
    %691 = vmatpush1.bf16.msra.mxu0 %v673
    %692 = vmatprep.subr.bf16.mxu0 0
    %693 = vmatpush1.bf16.msra.mxu0 %v674
    %694 = vmatprep.subr.bf16.mxu0 0
    %695 = vmatpush1.bf16.msra.mxu0 %v675
    %696 = vmatprep.subr.bf16.mxu0 0
    %697 = vmatpush1.bf16.msra.mxu0 %v676
    %698 = vmatprep.subr.bf16.mxu0 0
    %699 = vmatpush1.bf16.msra.mxu0 %v677
    %700 = vmatprep.subr.bf16.mxu0 0
    %701 = vmatpush1.bf16.msra.mxu0 %v678
    %702 = vmatprep.subr.bf16.mxu0 0
    %703 = vmatpush1.bf16.msra.mxu0 %v679
    %704 = vmatprep.subr.bf16.mxu0 0
    %705 = vmatpush1.bf16.msra.mxu0 0
    %706 = vmatprep.subr.bf16.mxu0 0
    %707 = vmatpush1.bf16.msra.mxu0 0
    %708 = vmatprep.subr.bf16.mxu0 0
    %709 = vmatpush1.bf16.msra.mxu0 0
    %710 = vmatprep.subr.bf16.mxu0 0
    %711 = vmatpush1.bf16.msra.mxu0 0
    %712 = vmatprep.subr.bf16.mxu0 0
    %713 = vmatpush1.bf16.msra.mxu0 0
    %714 = vmatprep.subr.bf16.mxu0 0
    %715 = vmatpush1.bf16.msra.mxu0 0
    %716 = vmatprep.subr.bf16.mxu0 0
    %717 = vmatpush1.bf16.msra.mxu0 0
    %718 = vmatprep.subr.bf16.mxu0 0
    %719 = vmatpush1.bf16.msra.mxu0 0
    %720 = vmatprep.mubr.bf16.mxu0 0
    %721 = vmatmul.mubr.bf16.gmra.mrb[0].mxu0 %v618
    %v722 = vpop.f32.mrb[0].mxu0
    %v723 = vadd.f32 %v639, %v722
    %v724 = vpop.f32.mrb[0].mxu0
    %v725 = vpop.f32.mrb[0].mxu0
    %v726 = vpop.f32.mrb[0].mxu0
    %727 = vdwg.mxu0
    %v728 = vadd.f32 %v506, %v723
    %v729 = vld [vmem:[%s3] sm:$0xf]
    %v730 = vpack.c.bf16 %v728, %v728
    %731 = vmatprep.subr.bf16.mxu0 0
    %732 = vmatpush1.bf16.xpose.msra.mxu0 %v730
    %733 = vmatprep.subr.bf16.mxu0 0
    %734 = vmatpush1.bf16.xpose.msra.mxu0 0
    %735 = vmatprep.subr.bf16.mxu0 0
    %736 = vmatpush1.bf16.xpose.msra.mxu0 0
    %737 = vmatprep.subr.bf16.mxu0 0
    %738 = vmatpush1.bf16.xpose.msra.mxu0 0
    %739 = vmatprep.subr.bf16.mxu0 0
    %740 = vmatpush1.bf16.xpose.msra.mxu0 0
    %741 = vmatprep.subr.bf16.mxu0 0
    %742 = vmatpush1.bf16.xpose.msra.mxu0 0
    %743 = vmatprep.subr.bf16.mxu0 0
    %744 = vmatpush1.bf16.xpose.msra.mxu0 0
    %745 = vmatprep.subr.bf16.mxu0 0
    %746 = vmatpush1.bf16.xpose.msra.mxu0 0
    %747 = vmatprep.subr.bf16.mxu0 0
    %748 = vmatpush1.bf16.xpose.msra.mxu0 0
    %749 = vmatprep.subr.bf16.mxu0 0
    %750 = vmatpush1.bf16.xpose.msra.mxu0 0
    %751 = vmatprep.subr.bf16.mxu0 0
    %752 = vmatpush1.bf16.xpose.msra.mxu0 0
    %753 = vmatprep.subr.bf16.mxu0 0
    %754 = vmatpush1.bf16.xpose.msra.mxu0 0
    %755 = vmatprep.subr.bf16.mxu0 0
    %756 = vmatpush1.bf16.xpose.msra.mxu0 0
    %757 = vmatprep.subr.bf16.mxu0 0
    %758 = vmatpush1.bf16.xpose.msra.mxu0 0
    %759 = vmatprep.subr.bf16.mxu0 0
    %760 = vmatpush1.bf16.xpose.msra.mxu0 0
    %761 = vmatprep.subr.bf16.mxu0 0
    %762 = vmatpush1.bf16.xpose.msra.mxu0 0
    %763 = vmatprep.mubr.bf16.mxu0 0
    %764 = vmatmul.mubr.bf16.gmra.mrb[0].mxu0 %v729
    %v765 = vpop.f32.mrb[0].mxu0
    %v766 = vadd.f32 0.0, %v765
    %v767 = vpop.f32.mrb[0].mxu0
    %v768 = vpop.f32.mrb[0].mxu0
    %v769 = vpop.f32.mrb[0].mxu0
    %770 = vdwg.mxu0
    %vm771 = vcmask 64512
    %772 = vst.msk [vmem:[#allocation9] sm:$0xff] %vm771, %v766
    // Predicated region
    $region30: #{tpu_custom_call.1} parent=1 // pred_check
      _
    $region31: #{tpu_custom_call.1} parent=1 // pred_check_branch
      %774 = sbr.rel (0) target = $region33
    $region32: #{tpu_custom_call.1} parent=1 // pred_region
      %s776 = ssub.s32 128, 128
      %777 = vsyncadd [#allocation5], %s776
      %s779 = sshll.u32 [#allocation9], 4
      %s780 = int_to_ptr.vmem [resolvable:$true] %s779
      %782 = dma.vmem_to_hbm [thread:$0]  %s780, 128, %s4, [#allocation5]
    $region33: #{tpu_custom_call.1} parent=1 // pred_fallthru
      _
    // Predicated region
    $region34: #{tpu_custom_call.1} parent=1 // pred_check
      _
    $region35: #{tpu_custom_call.1} parent=1 // pred_check_branch
      %784 = sbr.rel (0) target = $region37
    $region36: #{tpu_custom_call.1} parent=1 // pred_region
      %785 = dma.done [#allocation5], 128
    $region37: #{tpu_custom_call.1} parent=1 // pred_fallthru
      _
    %786 = vsyncpa [#allocation4], 1
    %787 = vsyncpa [#allocation7], 1
    %788 = vsyncpa [#allocation5], 1

</llo_original>
